<compile_context>
chip_gen: v5e
topology: v5e:2x2
jax: 0.10.0
libtpu: 0.0.40
codegen_flags: <defaults>
</compile_context>

<pallas_src>
import jax
import jax.numpy as jnp
from jax.experimental import pallas as pl
from jax.experimental.pallas import tpu as pltpu

# Double-buffered tile budget: leave headroom under v7x's 32 MiB scoped /
# 64 MiB physical VMEM (v5e/v6e have 128 MiB physical; we raise their scoped
# default explicitly below).
_VMEM_TILE_BUDGET = 28 << 20


def _symm_mul_kernel(x_ref, w_ref, o_ref):
    # w_ref already holds a (W + W^T) tile: one VPU multiply + cast.
    o_ref[...] = (x_ref[...] * w_ref[...]).astype(o_ref.dtype)


def _symm_twofeed_kernel(x_ref, wij_ref, wji_ref, o_ref):
    # Symmetrize tile-locally: W[i,j] + transpose(W[j,i]).  The small XLU
    # transpose is hidden under the tile DMA; then one VPU multiply + cast.
    w_symm = wij_ref[...] + jnp.transpose(wji_ref[...])
    o_ref[...] = (x_ref[...] * w_symm).astype(o_ref.dtype)


def symm_linear(x: jax.Array, weight: jax.Array, *, block: int | None = None) -> jax.Array:
    """out = x * (weight.T + weight).   x: (F, F) or (B, F, F); weight: (F, F)."""
    F = weight.shape[0]
    assert weight.shape == (F, F), "weight must be square (F, F)"

    squeeze_batch = x.ndim == 2
    if squeeze_batch:
        x = x[None]
    B = x.shape[0]
    assert x.shape == (B, F, F), "input must be (F, F) or (B, F, F)"

    out_dtype = x.dtype
    itemsize = max(jnp.dtype(x.dtype).itemsize, jnp.dtype(weight.dtype).itemsize)
    lane_ok = (F % 128 == 0)

    # Precompute W_symm in the wrapper when the extra O(F^2) pass amortizes
    # across batch elements, or when the two-feed trick cannot tile cleanly.
    use_presymm = (B >= 2) or (not lane_ok)

    if use_presymm:
        w_symm = (weight + jnp.transpose(weight)).astype(weight.dtype)
        n_ops = 3  # x tile, w tile, out tile (each double-buffered)

        if lane_ok:
            if block is None:
                block = next(
                    t for t in (1024, 512, 256, 128)
                    if F % t == 0 and n_ops * 2 * t * t * itemsize <= _VMEM_TILE_BUDGET
                )
            assert F % block == 0 and (block % 128 == 0 or block == F), \
                "block must divide F and be a multiple of 128 (or equal F)"
            tm = tn = block
        else:
            # Row-panel fallback: full lanes (tn = F), sublane-tiled rows.
            tn = F
            tm = None
            for t in range(8, F + 1, 8):
                if F % t == 0 and n_ops * 2 * t * F * itemsize <= _VMEM_TILE_BUDGET:
                    tm = t
            if tm is None:
                # TODO(synk): very large F with no multiple-of-8 divisor may
                # exceed scoped VMEM with a full-array block.
                tm = F

        grid = (F // tm, F // tn, B)  # batch INNERMOST -> weight-DMA elision
        in_specs = [
            pl.BlockSpec((None, tm, tn), lambda i, j, b: (b, i, j)),
            # Ignores `b`: Pallas skips re-fetching this tile for b > 0.
            pl.BlockSpec((tm, tn), lambda i, j, b: (i, j)),
        ]
        out_specs = pl.BlockSpec((None, tm, tn), lambda i, j, b: (b, i, j))
        kernel = _symm_mul_kernel
        operands = (x, w_symm)
        out_shape = jax.ShapeDtypeStruct((B, F, F), out_dtype)
        dim_sem = ("parallel", "parallel", "arbitrary")
        bytes_accessed = (2 * B * F * F) * jnp.dtype(x.dtype).itemsize \
            + F * F * jnp.dtype(weight.dtype).itemsize
    else:
        # B == 1 and F % 128 == 0: two-feed tile-local symmetrization (no
        # extra wrapper pass over W).
        x2 = x[0]
        n_ops = 4  # x, W[i,j], W[j,i], out
        if block is None:
            block = next(
                t for t in (512, 256, 128)
                if F % t == 0 and n_ops * 2 * t * t * itemsize <= _VMEM_TILE_BUDGET
            )
        assert F % block == 0 and (block % 128 == 0 or block == F), \
            "block must divide F and be a multiple of 128 (or equal F)"
        tm = tn = block

        grid = (F // tm, F // tn)
        in_specs = [
            pl.BlockSpec((tm, tn), lambda i, j: (i, j)),   # x tile
            pl.BlockSpec((tm, tn), lambda i, j: (i, j)),   # W[i, j]
            pl.BlockSpec((tn, tm), lambda i, j: (j, i)),   # W[j, i] (transposed in-kernel)
        ]
        out_specs = pl.BlockSpec((tm, tn), lambda i, j: (i, j))
        kernel = _symm_twofeed_kernel
        operands = (x2, weight, weight)
        out_shape = jax.ShapeDtypeStruct((F, F), out_dtype)
        dim_sem = ("parallel", "parallel")
        bytes_accessed = (2 * F * F) * jnp.dtype(x.dtype).itemsize \
            + (2 * F * F) * jnp.dtype(weight.dtype).itemsize

    # Raise scoped-VMEM limit so large tiles compile on v5e (16 MiB default);
    # never needs more than ~32 MiB (safe on v7x's 64 MiB physical VMEM too).
    vmem_limit = max(n_ops * 2 * int(tm) * int(tn) * itemsize + (4 << 20), 32 << 20)

    out = pl.pallas_call(
        kernel,
        out_shape=out_shape,
        grid=grid,
        in_specs=in_specs,
        out_specs=out_specs,
        compiler_params=pltpu.CompilerParams(
            dimension_semantics=dim_sem,
            vmem_limit_bytes=int(vmem_limit),
        ),
        cost_estimate=pl.CostEstimate(
            flops=2 * B * F * F,          # one add + one mul per element
            transcendentals=0,
            bytes_accessed=int(bytes_accessed),
        ),
    )(*operands)

    if not use_presymm:
        out = out[None]  # restore the (B=1) axis
    return out[0] if squeeze_batch else out


if __name__ == "__main__":
    key = jax.random.PRNGKey(0)
    k_w, k_x1, k_x2, k_w3, k_x3 = jax.random.split(key, 5)

    # --- Batched: B=2, F=256, block=128 -> precomputed-W_symm path,
    #     grid (2, 2, 2) with batch innermost (weight-DMA elision). ---
    B, F = 2, 256
    weight = jax.random.uniform(
        k_w, (F, F), dtype=jnp.float32, minval=-0.1, maxval=0.1
    )  # mirrors weight.data.uniform_(-0.1, 0.1)
    x = jax.random.normal(k_x1, (B, F, F), dtype=jnp.float32)
    out = jax.block_until_ready(symm_linear(x, weight, block=128))
    ref = x * (weight.T + weight)
    assert out.shape == ref.shape and out.dtype == ref.dtype
    assert jnp.allclose(out, ref, atol=1e-6, rtol=1e-6), "batched mismatch vs reference"

    # --- Unbatched tiled: F=256, block=128 -> two-feed path, grid (2, 2),
    #     exercises the swapped W[j,i] index_map. ---
    x2 = jax.random.normal(k_x2, (F, F), dtype=jnp.float32)
    out2 = jax.block_until_ready(symm_linear(x2, weight, block=128))
    ref2 = x2 * (weight.T + weight)
    assert jnp.allclose(out2, ref2, atol=1e-6, rtol=1e-6), "2-D tiled mismatch vs reference"

    # --- Unbatched single-block: F=128, auto block (matches original API). ---
    F3 = 128
    w3 = jax.random.uniform(k_w3, (F3, F3), dtype=jnp.float32, minval=-0.1, maxval=0.1)
    x3 = jax.random.normal(k_x3, (F3, F3), dtype=jnp.float32)
    out3 = jax.block_until_ready(symm_linear(x3, w3))
    ref3 = x3 * (w3.T + w3)
    assert jnp.allclose(out3, ref3, atol=1e-6, rtol=1e-6), "2-D single-block mismatch vs reference"

    print("KERNEL_OK")
</pallas_src>

<mosaic_0001>
module attributes {stable_mosaic.version = 11 : i64} {
  func.func @_symm_mul_kernel(%arg0: i32, %arg1: i32, %arg2: i32, %arg3: memref<1x128x128xf32, #tpu.memory_space<vmem>>, %arg4: memref<128x128xf32, #tpu.memory_space<vmem>>, %arg5: memref<1x128x128xf32, #tpu.memory_space<vmem>>) attributes {dimension_semantics = [#tpu.dimension_semantics<parallel>, #tpu.dimension_semantics<parallel>, #tpu.dimension_semantics<arbitrary>], iteration_bounds = array<i64: 2, 2, 2>, scalar_prefetch = 0 : i64, scratch_operands = 0 : i64, tpu.core_type = #tpu.core_type<tc>, window_params = [{transform_indices = @transform_0, window_bounds = array<i64: 1, 128, 128>}, {transform_indices = @transform_1, window_bounds = array<i64: 128, 128>}, {transform_indices = @transform_2, window_bounds = array<i64: 1, 128, 128>}]} {
    %c0 = arith.constant 0 : index
    %c0_0 = arith.constant 0 : index
    %c0_1 = arith.constant 0 : index
    %0 = vector.load %arg3[%c0, %c0_0, %c0_1] : memref<1x128x128xf32, #tpu.memory_space<vmem>>, vector<1x128x128xf32>
    %1 = vector.shape_cast %0 : vector<1x128x128xf32> to vector<128x128xf32>
    %c0_2 = arith.constant 0 : index
    %c0_3 = arith.constant 0 : index
    %2 = vector.load %arg4[%c0_2, %c0_3] : memref<128x128xf32, #tpu.memory_space<vmem>>, vector<128x128xf32>
    %3 = arith.mulf %1, %2 : vector<128x128xf32>
    %c0_4 = arith.constant 0 : index
    %c0_5 = arith.constant 0 : index
    %c0_6 = arith.constant 0 : index
    %4 = vector.load %arg5[%c0_4, %c0_5, %c0_6] : memref<1x128x128xf32, #tpu.memory_space<vmem>>, vector<1x128x128xf32>
    %5 = vector.shape_cast %4 : vector<1x128x128xf32> to vector<128x128xf32>
    %6 = vector.shape_cast %3 : vector<128x128xf32> to vector<1x128x128xf32>
    tpu.vector_store %arg5[%c0_4, %c0_5, %c0_6], %6 {strides = array<i32>} : memref<1x128x128xf32, #tpu.memory_space<vmem>>, vector<1x128x128xf32>,
    return
  }
  func.func @transform_0(%arg0: i32, %arg1: i32, %arg2: i32) -> (i32, i32, i32) {
    %c0_i32 = arith.constant 0 : i32
    return %arg2, %arg0, %arg1 : i32, i32, i32
  }
  func.func @transform_1(%arg0: i32, %arg1: i32, %arg2: i32) -> (i32, i32) {
    %c0_i32 = arith.constant 0 : i32
    return %arg0, %arg1 : i32, i32
  }
  func.func @transform_2(%arg0: i32, %arg1: i32, %arg2: i32) -> (i32, i32, i32) {
    %c0_i32 = arith.constant 0 : i32
    return %arg2, %arg0, %arg1 : i32, i32, i32
  }
}

</mosaic_0001>

<llo_original>
// kernel: tpu_custom_call.1
$region0: #{tpu_custom_call.1}
  #allocation0 [shape = 'u32[]', space=smem, size = 0x4, offset = 0x4, fixed_abs, tag = 'smem constant byte address 0x4 - core index']
  #allocation1 [shape = 'u32[72,128]{1,0:T(1,128)}', space=vmem, size = 0x9000, scoped, tag = 'internal scratch']
  %s0 = inlined_call_operand.hbm [shape: f32[2,256,256], index: 0, kind: input, shape index: {}]
  %s1 = inlined_call_operand.hbm [shape: f32[256,256], index: 1, kind: input, shape index: {}]
  %s2 = inlined_call_operand.hbm [shape: f32[2,256,256], index: 2, kind: output, shape index: {}]
  %s3 = sld [smem:[#allocation0]]
  $region49: #{tpu_custom_call.1} parent=0
    _
  %s5 = ssub.s32 1, %s3
  %s6 = scalar_select 0, %s5, %s3
  $region1: #{tpu_custom_call.1} parent=0
    #allocation2 [shape = 'u8[131072]{0}', space=vmem, size = 0x20000, scoped, tag = 'input window, operand 0']
    #allocation3 [shape = 's32[2]{0}', space=sflag, size = 0x8, scoped, tag = 'scoped memory for tpu_custom_call.1']
    #allocation4 [shape = 's32[2]{0}', space=sflag, size = 0x8, scoped, tag = 'scoped memory for tpu_custom_call.1']
    #allocation5 [shape = 'u8[131072]{0}', space=vmem, size = 0x20000, scoped, tag = 'input window, operand 1']
    #allocation6 [shape = 's32[2]{0}', space=sflag, size = 0x8, scoped, tag = 'scoped memory for tpu_custom_call.1']
    #allocation7 [shape = 'u8[131072]{0}', space=vmem, size = 0x20000, scoped, tag = 'output window, operand 0']
    %7 = vsyncpa [#allocation3], 0
    %s8 = scalar_lea.sflag [#allocation3], 1
    %9 = vsyncpa %s8, 0
    %10 = vsyncpa [#allocation6], 0
    %s11 = scalar_lea.sflag [#allocation6], 1
    %12 = vsyncpa %s11, 0
    %13 = vsyncpa [#allocation4], 0
    %s14 = scalar_lea.sflag [#allocation4], 1
    %15 = vsyncpa %s14, 0
    loop: start=0, step=1, limit=10
    $region2: #{tpu_custom_call.1} parent=1 // loop_pre_header
      _
    $region3: #{tpu_custom_call.1} parent=1 // loop_header
      %s17 = sphi 0, %s21
      %p18 = scmp.ge.s32.totalorder %s17, 10
      %s24 = sphi 0, %s43
      %s25 = sphi 0, %s39
      %s26 = sphi 0, %s35
      %s27 = sphi 0, %s24
      %s28 = sphi 0, %s25
      %s29 = sphi 0, %s26
      %s30 = sphi 0, %s27
      %s31 = sphi 0, %s28
      %s32 = sphi 0, %s29
      %s50 = sphi 0, %s52
      %s53 = sphi 0, %s50
      %s54 = sphi 0, %s53
      %s70 = sphi 0, %s54
      %s78 = sphi 0, %s80
      %s81 = sphi 0, %s78
      %s82 = sphi 0, %s81
      %s98 = sphi 0, %s82
      %s108 = sphi 0, %s110
      %s111 = sphi 0, %s108
      %s112 = sphi 0, %s111
      %s128 = sphi 0, %s112
    $region4: #{tpu_custom_call.1} parent=1 // loop_header_branch
      %20 = sbr.rel (%p18) target = $region8
    $region5: #{tpu_custom_call.1} parent=1 // loop_body
      %s22 = ssub.s32 %s17, 1
      %s23 = ssub.s32 %s17, 2
      %s33 = sadd.s32 1, %s26
      %p34 = scmp.ge.s32.totalorder %s33, 2
      %s35 = scalar_select %p34, 0, %s33
      %s36 = sadd.s32 1, %s25
      %s37 = scalar_select %p34, %s36, %s25
      %p38 = scmp.ge.s32.totalorder %s37, 2
      %s39 = scalar_select %p38, 0, %s37
      %s40 = sadd.s32 1, %s24
      %s41 = scalar_select %p38, %s40, %s24
      %p42 = scmp.ge.s32.totalorder %s41, 2
      %s43 = scalar_select %p42, 0, %s41
      %s44 = ssub.s32 %s26, %s35
      %s45 = ssub.s32 %s24, %s43
      %s46 = sor.u32 %s44, %s45
      %s47 = ssub.s32 %s25, %s39
      %s48 = sor.u32 %s46, %s47
      %p49 = scmp.eq.s32.totalorder %s48, 0
      %s51 = sadd.s32 %s50, 1
      %s52 = scalar_select %p49, %s50, %s51
      %p55 = pneg %p49
      %p56 = scmp.eq.s32.totalorder %s17, 7
      %p57 = por %p55, %p56
      %p58 = scmp.ne.s32.totalorder %s50, %s53
      %p59 = scmp.eq.s32.totalorder %s17, 0
      %p60 = por %p58, %p59
      %p61 = scmp.ne.s32.totalorder %s50, %s53
      %p62 = scmp.eq.s32.totalorder %s22, 7
      %p63 = por %p61, %p62
      %p64 = scmp.ne.s32.totalorder %s53, %s54
      %p65 = scmp.eq.s32.totalorder %s22, 0
      %p66 = por %p64, %p65
      %p67 = scmp.ne.s32.totalorder %s53, %s54
      %p68 = scmp.eq.s32.totalorder %s23, 7
      %p69 = por %p67, %p68
      %p71 = scmp.ne.s32.totalorder %s54, %s70
      %p72 = scmp.eq.s32.totalorder %s23, 0
      %p73 = por %p71, %p72
      %s74 = ssub.s32 %s24, %s43
      %s75 = ssub.s32 %s25, %s39
      %s76 = sor.u32 %s74, %s75
      %p77 = scmp.eq.s32.totalorder %s76, 0
      %s79 = sadd.s32 %s78, 1
      %s80 = scalar_select %p77, %s78, %s79
      %p83 = pneg %p77
      %p84 = scmp.eq.s32.totalorder %s17, 7
      %p85 = por %p83, %p84
      %p86 = scmp.ne.s32.totalorder %s78, %s81
      %p87 = scmp.eq.s32.totalorder %s17, 0
      %p88 = por %p86, %p87
      %p89 = scmp.ne.s32.totalorder %s78, %s81
      %p90 = scmp.eq.s32.totalorder %s22, 7
      %p91 = por %p89, %p90
      %p92 = scmp.ne.s32.totalorder %s81, %s82
      %p93 = scmp.eq.s32.totalorder %s22, 0
      %p94 = por %p92, %p93
      %p95 = scmp.ne.s32.totalorder %s81, %s82
      %p96 = scmp.eq.s32.totalorder %s23, 7
      %p97 = por %p95, %p96
      %p99 = scmp.ne.s32.totalorder %s82, %s98
      %p100 = scmp.eq.s32.totalorder %s23, 0
      %p101 = por %p99, %p100
      %s102 = ssub.s32 %s26, %s35
      %s103 = ssub.s32 %s24, %s43
      %s104 = sor.u32 %s102, %s103
      %s105 = ssub.s32 %s25, %s39
      %s106 = sor.u32 %s104, %s105
      %p107 = scmp.eq.s32.totalorder %s106, 0
      %s109 = sadd.s32 %s108, 1
      %s110 = scalar_select %p107, %s108, %s109
      %p113 = pneg %p107
      %p114 = scmp.eq.s32.totalorder %s17, 7
      %p115 = por %p113, %p114
      %p116 = scmp.ne.s32.totalorder %s108, %s111
      %p117 = scmp.eq.s32.totalorder %s17, 0
      %p118 = por %p116, %p117
      %p119 = scmp.ne.s32.totalorder %s108, %s111
      %p120 = scmp.eq.s32.totalorder %s22, 7
      %p121 = por %p119, %p120
      %p122 = scmp.ne.s32.totalorder %s111, %s112
      %p123 = scmp.eq.s32.totalorder %s22, 0
      %p124 = por %p122, %p123
      %p125 = scmp.ne.s32.totalorder %s111, %s112
      %p126 = scmp.eq.s32.totalorder %s23, 7
      %p127 = por %p125, %p126
      %p129 = scmp.ne.s32.totalorder %s112, %s128
      %p130 = scmp.eq.s32.totalorder %s23, 0
      %p131 = por %p129, %p130
      %p132 = scmp.le.s32.totalorder 1, %s17
      %p133 = scmp.lt.s32.totalorder %s17, 9
      %p134 = pnand %p132, %p133
      %p135 = pneg %p134
      // Predicated region
      $region9: #{tpu_custom_call.1} parent=5 // pred_check
        _
      $region10: #{tpu_custom_call.1} parent=5 // pred_check_branch
        %137 = sbr.rel (%p134) target = $region12
      $region11: #{tpu_custom_call.1} parent=5 // pred_region
        %s138 = ssub.s32 %s17, 1
      $region12: #{tpu_custom_call.1} parent=5 // pred_fallthru
        _
      %p139 = scmp.lt.s32.totalorder %s17, 8
      // Predicated region
      $region13: #{tpu_custom_call.1} parent=5 // pred_check
        %p140 = pneg %p139
      $region14: #{tpu_custom_call.1} parent=5 // pred_check_branch
        %142 = sbr.rel (%p140) target = $region16
      $region15: #{tpu_custom_call.1} parent=5 // pred_region
        // Predicated region
        $region17: #{tpu_custom_call.1} parent=15 // pred_check
          %p143 = pneg %p60
        $region18: #{tpu_custom_call.1} parent=15 // pred_check_branch
          %145 = sbr.rel (%p143) target = $region20
        $region19: #{tpu_custom_call.1} parent=15 // pred_region
          %s146 = sand.u32 %s50, 1
          %s147 = scalar_lea.sflag [#allocation3], %s146
          %s148 = sand.u32 %s50, 1
          %s149 = smul.addr %s148, 128
          %s150 = scalar_lea.vmem [#allocation2], %s149
          %s151 = smul.u32 16, %s24
          %153 = vsyncadd %s147, 0
          %s154 = smul.addr %s151, 2
          %s155 = sadd.s32 %s25, %s154
          %s156 = smul.addr %s26, 64
          %s157 = sadd.s32 %s155, %s156
          %s158 = smul.addr %s157, 8
          %s159 = scalar_lea.hbm %s0, %s158
          %s160 = sshll.u32 %s159, 4
          %s161 = int_to_ptr.hbm [resolvable:$true] %s160
          %s162 = sshll.u32 %s150, 4
          %s163 = int_to_ptr.vmem [resolvable:$true] %s162
          %168 = dma.hbm_to_vmem [thread:$0]  %s161, 2048, %s163, %s147, 256, 128, 8
        $region20: #{tpu_custom_call.1} parent=15 // pred_fallthru
          _
        // Predicated region
        $region21: #{tpu_custom_call.1} parent=15 // pred_check
          %p169 = pneg %p88
        $region22: #{tpu_custom_call.1} parent=15 // pred_check_branch
          %171 = sbr.rel (%p169) target = $region24
        $region23: #{tpu_custom_call.1} parent=15 // pred_region
          %s172 = sand.u32 %s78, 1
          %s173 = scalar_lea.sflag [#allocation6], %s172
          %s174 = sand.u32 %s78, 1
          %s175 = smul.addr %s174, 128
          %s176 = scalar_lea.vmem [#allocation5], %s175
          %s177 = smul.u32 16, %s24
          %179 = vsyncadd %s173, 0
          %s180 = smul.addr %s177, 2
          %s181 = sadd.s32 %s25, %s180
          %s182 = smul.addr %s181, 8
          %s183 = scalar_lea.hbm %s1, %s182
          %s184 = sshll.u32 %s183, 4
          %s185 = int_to_ptr.hbm [resolvable:$true] %s184
          %s186 = sshll.u32 %s176, 4
          %s187 = int_to_ptr.vmem [resolvable:$true] %s186
          %192 = dma.hbm_to_vmem [thread:$0]  %s185, 2048, %s187, %s173, 256, 128, 8
        $region24: #{tpu_custom_call.1} parent=15 // pred_fallthru
          _
      $region16: #{tpu_custom_call.1} parent=5 // pred_fallthru
        _
      %p193 = scmp.le.s32.totalorder 1, %s17
      %p194 = scmp.lt.s32.totalorder %s17, 9
      %p195 = pnand %p193, %p194
      %p196 = pneg %p195
      // Predicated region
      $region25: #{tpu_custom_call.1} parent=5 // pred_check
        _
      $region26: #{tpu_custom_call.1} parent=5 // pred_check_branch
        %198 = sbr.rel (%p195) target = $region28
      $region27: #{tpu_custom_call.1} parent=5 // pred_region
        %s199 = ssub.s32 %s17, 1
        %s200 = sand.u32 %s53, 1
        %s201 = scalar_lea.sflag [#allocation3], %s200
        %s202 = sand.u32 %s53, 1
        %s203 = smul.addr %s202, 128
        %s204 = scalar_lea.vmem [#allocation2], %s203
        // Predicated region
        $region29: #{tpu_custom_call.1} parent=27 // pred_check
          %p205 = pneg %p66
        $region30: #{tpu_custom_call.1} parent=27 // pred_check_branch
          %207 = sbr.rel (%p205) target = $region32
        $region31: #{tpu_custom_call.1} parent=27 // pred_region
          %209 = dma.done %s201, 2048
        $region32: #{tpu_custom_call.1} parent=27 // pred_fallthru
          _
        %s210 = sand.u32 %s81, 1
        %s211 = scalar_lea.sflag [#allocation6], %s210
        %s212 = sand.u32 %s81, 1
        %s213 = smul.addr %s212, 128
        %s214 = scalar_lea.vmem [#allocation5], %s213
        // Predicated region
        $region33: #{tpu_custom_call.1} parent=27 // pred_check
          %p215 = pneg %p94
        $region34: #{tpu_custom_call.1} parent=27 // pred_check_branch
          %217 = sbr.rel (%p215) target = $region36
        $region35: #{tpu_custom_call.1} parent=27 // pred_region
          %219 = dma.done %s211, 2048
        $region36: #{tpu_custom_call.1} parent=27 // pred_fallthru
          _
        %s220 = sand.u32 %s53, 1
        %s221 = scalar_lea.sflag [#allocation3], %s220
        %s222 = sand.u32 %s53, 1
        %s223 = smul.addr %s222, 128
        %s224 = scalar_lea.vmem [#allocation2], %s223
        %p225 = pneg %p66
        %p226 = pneg %p63
        %s227 = sand.u32 %s81, 1
        %s228 = scalar_lea.sflag [#allocation6], %s227
        %s229 = sand.u32 %s81, 1
        %s230 = smul.addr %s229, 128
        %s231 = scalar_lea.vmem [#allocation5], %s230
        %p232 = pneg %p94
        %p233 = pneg %p91
        %p234 = pneg %p124
        %p235 = pneg %p121
        %s236 = sand.u32 %s111, 1
        %s237 = scalar_lea.sflag [#allocation4], %s236
        %s238 = sand.u32 %s111, 1
        %s239 = smul.addr %s238, 128
        %s240 = scalar_lea.vmem [#allocation7], %s239
        %s241 = smul.u32 16, %s27
        %s242 = smul.u32 16, %s27
        %s243 = smul.u32 16, %s27
        %v244 = vld [vmem:[%s204] sm:$0xff]
        %v245 = vld [vmem:[%s204 + $0x8] sm:$0xff]
        %v246 = vld [vmem:[%s204 + $0x10] sm:$0xff]
        %v247 = vld [vmem:[%s204 + $0x18] sm:$0xff]
        %v248 = vld [vmem:[%s204 + $0x20] sm:$0xff]
        %v249 = vld [vmem:[%s204 + $0x28] sm:$0xff]
        %v250 = vld [vmem:[%s204 + $0x30] sm:$0xff]
        %v251 = vld [vmem:[%s204 + $0x38] sm:$0xff]
        %v252 = vld [vmem:[%s204 + $0x40] sm:$0xff]
        %v253 = vld [vmem:[%s204 + $0x48] sm:$0xff]
        %v254 = vld [vmem:[%s204 + $0x50] sm:$0xff]
        %v255 = vld [vmem:[%s204 + $0x58] sm:$0xff]
        %v256 = vld [vmem:[%s204 + $0x60] sm:$0xff]
        %v257 = vld [vmem:[%s204 + $0x68] sm:$0xff]
        %v258 = vld [vmem:[%s204 + $0x70] sm:$0xff]
        %v259 = vld [vmem:[%s204 + $0x78] sm:$0xff]
        %v260 = vld [vmem:[%s214] sm:$0xff]
        %v261 = vld [vmem:[%s214 + $0x8] sm:$0xff]
        %v262 = vld [vmem:[%s214 + $0x10] sm:$0xff]
        %v263 = vld [vmem:[%s214 + $0x18] sm:$0xff]
        %v264 = vld [vmem:[%s214 + $0x20] sm:$0xff]
        %v265 = vld [vmem:[%s214 + $0x28] sm:$0xff]
        %v266 = vld [vmem:[%s214 + $0x30] sm:$0xff]
        %v267 = vld [vmem:[%s214 + $0x38] sm:$0xff]
        %v268 = vld [vmem:[%s214 + $0x40] sm:$0xff]
        %v269 = vld [vmem:[%s214 + $0x48] sm:$0xff]
        %v270 = vld [vmem:[%s214 + $0x50] sm:$0xff]
        %v271 = vld [vmem:[%s214 + $0x58] sm:$0xff]
        %v272 = vld [vmem:[%s214 + $0x60] sm:$0xff]
        %v273 = vld [vmem:[%s214 + $0x68] sm:$0xff]
        %v274 = vld [vmem:[%s214 + $0x70] sm:$0xff]
        %v275 = vld [vmem:[%s214 + $0x78] sm:$0xff]
        %v276 = vmul.f32 %v244, %v260
        %v277 = vmul.f32 %v245, %v261
        %v278 = vmul.f32 %v246, %v262
        %v279 = vmul.f32 %v247, %v263
        %v280 = vmul.f32 %v248, %v264
        %v281 = vmul.f32 %v249, %v265
        %v282 = vmul.f32 %v250, %v266
        %v283 = vmul.f32 %v251, %v267
        %v284 = vmul.f32 %v252, %v268
        %v285 = vmul.f32 %v253, %v269
        %v286 = vmul.f32 %v254, %v270
        %v287 = vmul.f32 %v255, %v271
        %v288 = vmul.f32 %v256, %v272
        %v289 = vmul.f32 %v257, %v273
        %v290 = vmul.f32 %v258, %v274
        %v291 = vmul.f32 %v259, %v275
        %292 = vst [vmem:[%s240] sm:$0xff] %v276
        %293 = vst [vmem:[%s240 + $0x8] sm:$0xff] %v277
        %294 = vst [vmem:[%s240 + $0x10] sm:$0xff] %v278
        %295 = vst [vmem:[%s240 + $0x18] sm:$0xff] %v279
        %296 = vst [vmem:[%s240 + $0x20] sm:$0xff] %v280
        %297 = vst [vmem:[%s240 + $0x28] sm:$0xff] %v281
        %298 = vst [vmem:[%s240 + $0x30] sm:$0xff] %v282
        %299 = vst [vmem:[%s240 + $0x38] sm:$0xff] %v283
        %300 = vst [vmem:[%s240 + $0x40] sm:$0xff] %v284
        %301 = vst [vmem:[%s240 + $0x48] sm:$0xff] %v285
        %302 = vst [vmem:[%s240 + $0x50] sm:$0xff] %v286
        %303 = vst [vmem:[%s240 + $0x58] sm:$0xff] %v287
        %304 = vst [vmem:[%s240 + $0x60] sm:$0xff] %v288
        %305 = vst [vmem:[%s240 + $0x68] sm:$0xff] %v289
        %306 = vst [vmem:[%s240 + $0x70] sm:$0xff] %v290
        %307 = vst [vmem:[%s240 + $0x78] sm:$0xff] %v291
        %s308 = sand.u32 %s111, 1
        %s309 = scalar_lea.sflag [#allocation4], %s308
        %s310 = sand.u32 %s111, 1
        %s311 = smul.addr %s310, 128
        %s312 = scalar_lea.vmem [#allocation7], %s311
        // Predicated region
        $region37: #{tpu_custom_call.1} parent=27 // pred_check
          %p313 = pneg %p121
        $region38: #{tpu_custom_call.1} parent=27 // pred_check_branch
          %315 = sbr.rel (%p313) target = $region40
        $region39: #{tpu_custom_call.1} parent=27 // pred_region
          %s316 = smul.u32 16, %s27
          %318 = vsyncadd %s309, 0
          %s319 = smul.addr %s316, 2
          %s320 = sadd.s32 %s28, %s319
          %s321 = smul.addr %s29, 64
          %s322 = sadd.s32 %s320, %s321
          %s323 = smul.addr %s322, 8
          %s324 = scalar_lea.hbm %s2, %s323
          %s325 = sshll.u32 %s312, 4
          %s326 = int_to_ptr.vmem [resolvable:$true] %s325
          %s327 = sshll.u32 %s324, 4
          %s328 = int_to_ptr.hbm [resolvable:$true] %s327
          %333 = dma.vmem_to_hbm [thread:$0]  %s326, 2048, %s328, %s309, 128, 256, 8
        $region40: #{tpu_custom_call.1} parent=27 // pred_fallthru
          _
      $region28: #{tpu_custom_call.1} parent=5 // pred_fallthru
        _
      %p334 = scmp.le.s32.totalorder 2, %s17
      // Predicated region
      $region41: #{tpu_custom_call.1} parent=5 // pred_check
        %p335 = pneg %p334
      $region42: #{tpu_custom_call.1} parent=5 // pred_check_branch
        %337 = sbr.rel (%p335) target = $region44
      $region43: #{tpu_custom_call.1} parent=5 // pred_region
        %s338 = ssub.s32 %s17, 2
        // Predicated region
        $region45: #{tpu_custom_call.1} parent=43 // pred_check
          %p339 = pneg %p127
        $region46: #{tpu_custom_call.1} parent=43 // pred_check_branch
          %341 = sbr.rel (%p339) target = $region48
        $region47: #{tpu_custom_call.1} parent=43 // pred_region
          %s342 = sand.u32 %s112, 1
          %s343 = scalar_lea.sflag [#allocation4], %s342
          %s344 = sand.u32 %s112, 1
          %s345 = smul.addr %s344, 128
          %s346 = scalar_lea.vmem [#allocation7], %s345
          %348 = dma.done %s343, 2048
        $region48: #{tpu_custom_call.1} parent=43 // pred_fallthru
          _
      $region44: #{tpu_custom_call.1} parent=5 // pred_fallthru
        _
    $region6: #{tpu_custom_call.1} parent=1 // loop_footer
      %s21 = sadd.s32 1, %s17
    $region7: #{tpu_custom_call.1} parent=1 // loop_footer_branch
      %16 = sbr.rel target = $region3
    $region8: #{tpu_custom_call.1} parent=1 // loop_exit
      _
    %349 = vsyncpa [#allocation3], 1
    %s350 = scalar_lea.sflag [#allocation3], 1
    %351 = vsyncpa %s350, 1
    %352 = vsyncpa [#allocation6], 1
    %s353 = scalar_lea.sflag [#allocation6], 1
    %354 = vsyncpa %s353, 1
    %355 = vsyncpa [#allocation4], 1
    %s356 = scalar_lea.sflag [#allocation4], 1
    %357 = vsyncpa %s356, 1

</llo_original>
